<compile_context>
chip_gen: v7x
topology: tpu7x:2x2x1
jax: 0.10.0
libtpu: 0.0.40
codegen_flags: <defaults>
</compile_context>

<pallas_src>
import math

import jax
import jax.numpy as jnp
from jax.experimental import pallas as pl
from jax.experimental.pallas import tpu as pltpu

SMOOTH = 1.0
LOG_CLAMP = -100.0           # torch binary_cross_entropy clamps log at -100
LANE = 128
MAX_TILE_ROWS = 2048         # 2048*128*4 B = 1 MiB per f32 input buffer


def _cdiv(a, b):
    return (a + b - 1) // b


def _round_up(x, m):
    return _cdiv(x, m) * m


def _sublane_multiple(dtype):
    # Native TPU tile is (8,128) of 32-bit words; narrower dtypes pack along
    # sublanes: f32 -> 8, bf16 -> 16, int8/bool -> 32.
    return 8 * (4 // jnp.dtype(dtype).itemsize)


def _make_kernel(*, tile_rows, group_rows, n_valid, rows_valid, binary, needs_mask):
    """Kernel closure for a given tiling, true N, valid rows, and BCE path."""
    inv_n = 1.0 / float(n_valid)
    groups = tile_rows // group_rows
    unroll = max(1, min(groups, 64 // group_rows))

    def kernel(x_ref, t_ref, o_ref, inter_acc, sx_acc, st_acc, bce_acc):
        k = pl.program_id(1)
        nk = pl.num_programs(1)

        @pl.when(k == 0)
        def _init():
            inter_acc[...] = jnp.zeros_like(inter_acc)
            sx_acc[...] = jnp.zeros_like(sx_acc)
            st_acc[...] = jnp.zeros_like(st_acc)
            bce_acc[...] = jnp.zeros_like(bce_acc)

        row_base = k * tile_rows
        if needs_mask:
            sub_iota = jax.lax.broadcasted_iota(jnp.int32, (group_rows, 1), 0)

        def collapse(v):  # (group_rows,128) -> (8,128): leading-axis VPU adds
            return v.reshape(group_rows // 8, 8, LANE).sum(axis=0)

        def body(g, carry):
            inter_c, sx_c, st_c, bce_c = carry
            start = pl.multiple_of(g * group_rows, group_rows)
            xg = x_ref[pl.ds(start, group_rows), :].astype(jnp.float32)
            tg = t_ref[pl.ds(start, group_rows), :].astype(jnp.float32)
            if needs_mask:
                # Edge-block DMA padding is unspecified: zero x and t there.
                # x = t = 0 is neutral for every partial sum (incl. BCE, since
                # the log clamp happens BEFORE the multiply: 0 * (-100) = 0).
                valid = (row_base + start + sub_iota) < rows_valid
                xg = jnp.where(valid, xg, 0.0)
                tg = jnp.where(valid, tg, 0.0)
            if binary:
                # Binary targets: one EUP log per element.
                bce_g = jnp.maximum(
                    jnp.log(jnp.where(tg > 0.5, xg, 1.0 - xg)), LOG_CLAMP)
            else:
                # General BCE; clamp before multiply keeps padding neutral.
                log_x = jnp.maximum(jnp.log(xg), LOG_CLAMP)
                log_1mx = jnp.maximum(jnp.log(1.0 - xg), LOG_CLAMP)
                bce_g = tg * log_x + (1.0 - tg) * log_1mx
            return (inter_c + collapse(xg * tg),
                    sx_c + collapse(xg),
                    st_c + collapse(tg),
                    bce_c + collapse(bce_g))

        zeros = jnp.zeros((8, LANE), jnp.float32)
        inter_p, sx_p, st_p, bce_p = jax.lax.fori_loop(
            0, groups, body, (zeros, zeros, zeros, zeros), unroll=unroll)

        # One scratch store per tile, not per group (v5e: 1 vst slot/bundle).
        inter_acc[...] += inter_p
        sx_acc[...] += sx_p
        st_acc[...] += st_p
        bce_acc[...] += bce_p

        @pl.when(k == nk - 1)
        def _finalize():
            inter = jnp.sum(inter_acc[...])
            sx = jnp.sum(sx_acc[...])
            st = jnp.sum(st_acc[...])
            bce_sum = jnp.sum(bce_acc[...])
            dice_i = 1.0 - (2.0 * inter + SMOOTH) / (sx + st + SMOOTH)
            bce_i = -bce_sum * inv_n
            loss_i = dice_i + bce_i
            o_ref[...] = jnp.broadcast_to(loss_i, o_ref.shape).astype(o_ref.dtype)

    return kernel


def dice_loss(inputs, targets):
    """inputs: (B, ...) probabilities in (0,1); targets: (B, ...) float in
    [0,1], or bool/integer binary masks (fast path). Returns
    mean(BCE) + mean(dice) over the batch, matching the PyTorch module."""
    B = inputs.shape[0]
    N = math.prod(inputs.shape[1:])

    x = inputs.reshape(B, N)
    t = targets.reshape(B, N)
    if t.dtype == jnp.bool_:
        t = t.astype(jnp.int8)
    binary = bool(jnp.issubdtype(t.dtype, jnp.integer))

    # Lane pad only when N is not a multiple of 128 (zero pads are neutral).
    rows = _cdiv(N, LANE)
    n_lane = rows * LANE
    if n_lane != N:
        x = jnp.pad(x, ((0, 0), (0, n_lane - N)))
        t = jnp.pad(t, ((0, 0), (0, n_lane - N)))
    x = x.reshape(B, rows, LANE)
    t = t.reshape(B, rows, LANE)

    # Balanced tiling: pick K first, then the dtype-aligned tile size.
    sub_mult = max(_sublane_multiple(x.dtype), _sublane_multiple(t.dtype))
    K = _cdiv(rows, MAX_TILE_ROWS)
    tile_rows = _round_up(_cdiv(rows, K), sub_mult)
    if tile_rows > rows:
        # Single small tile: pad < sub_mult rows of zeros (neutral) so the
        # block never exceeds the array extent. Only hits tiny inputs.
        x = jnp.pad(x, ((0, 0), (0, tile_rows - rows), (0, 0)))
        t = jnp.pad(t, ((0, 0), (0, tile_rows - rows), (0, 0)))
        rows = tile_rows
    K = _cdiv(rows, tile_rows)
    needs_mask = (rows % tile_rows) != 0

    kernel = _make_kernel(tile_rows=tile_rows, group_rows=sub_mult,
                          n_valid=N, rows_valid=rows, binary=binary,
                          needs_mask=needs_mask)

    cost = pl.CostEstimate(
        flops=int(10 * B * N),
        transcendentals=int((1 if binary else 2) * B * N),
        bytes_accessed=int(B * rows * LANE * (x.dtype.itemsize + t.dtype.itemsize)
                           + B * 8 * LANE * 4),
    )

    out = pl.pallas_call(
        kernel,
        out_shape=jax.ShapeDtypeStruct((B, 8, LANE), jnp.float32),
        grid_spec=pltpu.PrefetchScalarGridSpec(
            num_scalar_prefetch=0,
            grid=(B, K),
            in_specs=[
                pl.BlockSpec((None, tile_rows, LANE), lambda b, k: (b, k, 0)),
                pl.BlockSpec((None, tile_rows, LANE), lambda b, k: (b, k, 0)),
            ],
            out_specs=pl.BlockSpec((None, 8, LANE), lambda b, k: (b, 0, 0)),
            scratch_shapes=[pltpu.VMEM((8, LANE), jnp.float32)] * 4,
        ),
        compiler_params=pltpu.CompilerParams(
            dimension_semantics=("parallel", "arbitrary"),
            vmem_limit_bytes=32 * 1024 * 1024,
        ),
        cost_estimate=cost,
    )(x, t)

    # Per-sample losses live at [:, 0, 0]; batch mean = bce_mean + dice_mean.
    return jnp.mean(out[:, 0, 0])


def _dice_loss_ref(inputs, targets):
    """Pure-JAX reference mirroring the PyTorch forward."""
    B = inputs.shape[0]
    x = inputs.reshape(B, -1).astype(jnp.float32)
    t = targets.reshape(B, -1).astype(jnp.float32)
    inter = jnp.sum(x * t, axis=1)
    dice = 1.0 - (2.0 * inter + SMOOTH) / (jnp.sum(x, 1) + jnp.sum(t, 1) + SMOOTH)
    log_x = jnp.maximum(jnp.log(x), LOG_CLAMP)
    log_1mx = jnp.maximum(jnp.log(1.0 - x), LOG_CLAMP)
    bce = -jnp.mean(t * log_x + (1.0 - t) * log_1mx, axis=1)
    return jnp.mean(bce) + jnp.mean(dice)


if __name__ == "__main__":
    key = jax.random.PRNGKey(0)
    k1, k2, k3, k4 = jax.random.split(key, 4)

    # --- Small shape implied by the module (segmentation logits/masks). ---
    B, C, H, W = 2, 4, 16, 16
    inputs = jax.random.uniform(k1, (B, C, H, W), jnp.float32,
                                minval=1e-4, maxval=1.0 - 1e-4)
    targets_f = jax.random.bernoulli(k2, 0.5, (B, C, H, W)).astype(jnp.float32)

    # Generic (float-target) BCE path.
    loss = jax.block_until_ready(dice_loss(inputs, targets_f))
    ref = jax.block_until_ready(_dice_loss_ref(inputs, targets_f))
    assert jnp.allclose(loss, ref, rtol=1e-5, atol=1e-5), (loss, ref)

    # Binary fast path with narrow (int8) targets — same result.
    targets_i8 = targets_f.astype(jnp.int8)
    loss_b = jax.block_until_ready(dice_loss(inputs, targets_i8))
    assert jnp.allclose(loss_b, ref, rtol=1e-5, atol=1e-5), (loss_b, ref)

    # Larger ragged shape: exercises the lane pad + multi-tile K + in-kernel
    # edge-block masking path (no wrapper pad to a tile multiple).
    B2, C2, H2, W2 = 2, 4, 260, 260
    inputs2 = jax.random.uniform(k3, (B2, C2, H2, W2), jnp.float32,
                                 minval=1e-4, maxval=1.0 - 1e-4)
    targets2 = jax.random.bernoulli(k4, 0.5, (B2, C2, H2, W2)).astype(jnp.float32)
    loss2 = jax.block_until_ready(dice_loss(inputs2, targets2))
    ref2 = jax.block_until_ready(_dice_loss_ref(inputs2, targets2))
    assert jnp.allclose(loss2, ref2, rtol=1e-5, atol=1e-5), (loss2, ref2)

    print("KERNEL_OK")
</pallas_src>

<mosaic_0001>
module attributes {stable_mosaic.version = 11 : i64} {
  func.func @kernel(%arg0: i32, %arg1: i32, %arg2: memref<1x8x128xf32, #tpu.memory_space<vmem>>, %arg3: memref<1x8x128xf32, #tpu.memory_space<vmem>>, %arg4: memref<1x8x128xf32, #tpu.memory_space<vmem>>, %arg5: memref<8x128xf32, #tpu.memory_space<vmem>>, %arg6: memref<8x128xf32, #tpu.memory_space<vmem>>, %arg7: memref<8x128xf32, #tpu.memory_space<vmem>>, %arg8: memref<8x128xf32, #tpu.memory_space<vmem>>) attributes {dimension_semantics = [#tpu.dimension_semantics<parallel>, #tpu.dimension_semantics<arbitrary>], iteration_bounds = array<i64: 2, 1>, scalar_prefetch = 0 : i64, scratch_operands = 4 : i64, tpu.core_type = #tpu.core_type<tc>, window_params = [{transform_indices = @transform_0, window_bounds = array<i64: 1, 8, 128>}, {transform_indices = @transform_1, window_bounds = array<i64: 1, 8, 128>}, {transform_indices = @transform_2, window_bounds = array<i64: 1, 8, 128>}]} {
    %c0_i32 = arith.constant 0 : i32
    %0 = arith.cmpi eq, %arg1, %c0_i32 : i32
    %1 = arith.extui %0 : i1 to i32
    %c0_i32_0 = arith.constant 0 : i32
    %2 = arith.cmpi ne, %1, %c0_i32_0 : i32
    scf.if %2 {
      %cst_31 = arith.constant 0.000000e+00 : f32
      %53 = vector.broadcast %cst_31 : f32 to vector<8x128xf32>
      %c0_32 = arith.constant 0 : index
      %c0_33 = arith.constant 0 : index
      %54 = vector.load %arg5[%c0_32, %c0_33] : memref<8x128xf32, #tpu.memory_space<vmem>>, vector<8x128xf32>
      tpu.vector_store %arg5[%c0_32, %c0_33], %53 {strides = array<i32>} : memref<8x128xf32, #tpu.memory_space<vmem>>, vector<8x128xf32>,
      %cst_34 = arith.constant 0.000000e+00 : f32
      %55 = vector.broadcast %cst_34 : f32 to vector<8x128xf32>
      %c0_35 = arith.constant 0 : index
      %c0_36 = arith.constant 0 : index
      %56 = vector.load %arg6[%c0_35, %c0_36] : memref<8x128xf32, #tpu.memory_space<vmem>>, vector<8x128xf32>
      tpu.vector_store %arg6[%c0_35, %c0_36], %55 {strides = array<i32>} : memref<8x128xf32, #tpu.memory_space<vmem>>, vector<8x128xf32>,
      %cst_37 = arith.constant 0.000000e+00 : f32
      %57 = vector.broadcast %cst_37 : f32 to vector<8x128xf32>
      %c0_38 = arith.constant 0 : index
      %c0_39 = arith.constant 0 : index
      %58 = vector.load %arg7[%c0_38, %c0_39] : memref<8x128xf32, #tpu.memory_space<vmem>>, vector<8x128xf32>
      tpu.vector_store %arg7[%c0_38, %c0_39], %57 {strides = array<i32>} : memref<8x128xf32, #tpu.memory_space<vmem>>, vector<8x128xf32>,
      %cst_40 = arith.constant 0.000000e+00 : f32
      %59 = vector.broadcast %cst_40 : f32 to vector<8x128xf32>
      %c0_41 = arith.constant 0 : index
      %c0_42 = arith.constant 0 : index
      %60 = vector.load %arg8[%c0_41, %c0_42] : memref<8x128xf32, #tpu.memory_space<vmem>>, vector<8x128xf32>
      tpu.vector_store %arg8[%c0_41, %c0_42], %59 {strides = array<i32>} : memref<8x128xf32, #tpu.memory_space<vmem>>, vector<8x128xf32>,
    } else {
    }
    %cst = arith.constant 0.000000e+00 : f32
    %3 = vector.broadcast %cst : f32 to vector<8x128xf32>
    %c0_i32_1 = arith.constant 0 : i32
    %c8_i32 = arith.constant 8 : i32
    %4 = arith.muli %c0_i32_1, %c8_i32 : i32
    %5 = tpu.assume_multiple %4, 8 : i32
    %c0 = arith.constant 0 : index
    %6 = arith.index_cast %5 : i32 to index
    %c0_2 = arith.constant 0 : index
    %7 = vector.load %arg2[%c0, %6, %c0_2] : memref<1x8x128xf32, #tpu.memory_space<vmem>>, vector<1x8x128xf32>
    %8 = vector.shape_cast %7 : vector<1x8x128xf32> to vector<8x128xf32>
    %c0_3 = arith.constant 0 : index
    %9 = arith.index_cast %5 : i32 to index
    %c0_4 = arith.constant 0 : index
    %10 = vector.load %arg3[%c0_3, %9, %c0_4] : memref<1x8x128xf32, #tpu.memory_space<vmem>>, vector<1x8x128xf32>
    %11 = vector.shape_cast %10 : vector<1x8x128xf32> to vector<8x128xf32>
    %12 = math.log %8 : vector<8x128xf32>
    %cst_5 = arith.constant -1.000000e+02 : f32
    %13 = vector.broadcast %cst_5 : f32 to vector<8x128xf32>
    %14 = arith.maximumf %12, %13 : vector<8x128xf32>
    %cst_6 = arith.constant 1.000000e+00 : f32
    %15 = vector.broadcast %cst_6 : f32 to vector<8x128xf32>
    %16 = arith.subf %15, %8 : vector<8x128xf32>
    %17 = math.log %16 : vector<8x128xf32>
    %cst_7 = arith.constant -1.000000e+02 : f32
    %18 = vector.broadcast %cst_7 : f32 to vector<8x128xf32>
    %19 = arith.maximumf %17, %18 : vector<8x128xf32>
    %20 = arith.mulf %11, %14 : vector<8x128xf32>
    %cst_8 = arith.constant 1.000000e+00 : f32
    %21 = vector.broadcast %cst_8 : f32 to vector<8x128xf32>
    %22 = arith.subf %21, %11 : vector<8x128xf32>
    %23 = arith.mulf %22, %19 : vector<8x128xf32>
    %24 = arith.addf %20, %23 : vector<8x128xf32>
    %25 = arith.mulf %8, %11 : vector<8x128xf32>
    %26 = vector.shape_cast %25 : vector<8x128xf32> to vector<1x8x128xf32>
    %cst_9 = arith.constant dense<0.000000e+00> : vector<8x128xf32>
    %27 = vector.multi_reduction <add>, %26, %cst_9 [0] : vector<1x8x128xf32> to vector<8x128xf32>
    %28 = arith.addf %3, %27 : vector<8x128xf32>
    %29 = vector.shape_cast %8 : vector<8x128xf32> to vector<1x8x128xf32>
    %cst_10 = arith.constant dense<0.000000e+00> : vector<8x128xf32>
    %30 = vector.multi_reduction <add>, %29, %cst_10 [0] : vector<1x8x128xf32> to vector<8x128xf32>
    %31 = arith.addf %3, %30 : vector<8x128xf32>
    %32 = vector.shape_cast %11 : vector<8x128xf32> to vector<1x8x128xf32>
    %cst_11 = arith.constant dense<0.000000e+00> : vector<8x128xf32>
    %33 = vector.multi_reduction <add>, %32, %cst_11 [0] : vector<1x8x128xf32> to vector<8x128xf32>
    %34 = arith.addf %3, %33 : vector<8x128xf32>
    %35 = vector.shape_cast %24 : vector<8x128xf32> to vector<1x8x128xf32>
    %cst_12 = arith.constant dense<0.000000e+00> : vector<8x128xf32>
    %36 = vector.multi_reduction <add>, %35, %cst_12 [0] : vector<1x8x128xf32> to vector<8x128xf32>
    %37 = arith.addf %3, %36 : vector<8x128xf32>
    %c1_i32 = arith.constant 1 : i32
    %c0_13 = arith.constant 0 : index
    %c0_14 = arith.constant 0 : index
    %38 = vector.load %arg5[%c0_13, %c0_14] : memref<8x128xf32, #tpu.memory_space<vmem>>, vector<8x128xf32>
    %39 = arith.addf %38, %28 : vector<8x128xf32>
    %c0_15 = arith.constant 0 : index
    %c0_16 = arith.constant 0 : index
    %40 = vector.load %arg5[%c0_15, %c0_16] : memref<8x128xf32, #tpu.memory_space<vmem>>, vector<8x128xf32>
    tpu.vector_store %arg5[%c0_15, %c0_16], %39 {strides = array<i32>} : memref<8x128xf32, #tpu.memory_space<vmem>>, vector<8x128xf32>,
    %c0_17 = arith.constant 0 : index
    %c0_18 = arith.constant 0 : index
    %41 = vector.load %arg6[%c0_17, %c0_18] : memref<8x128xf32, #tpu.memory_space<vmem>>, vector<8x128xf32>
    %42 = arith.addf %41, %31 : vector<8x128xf32>
    %c0_19 = arith.constant 0 : index
    %c0_20 = arith.constant 0 : index
    %43 = vector.load %arg6[%c0_19, %c0_20] : memref<8x128xf32, #tpu.memory_space<vmem>>, vector<8x128xf32>
    tpu.vector_store %arg6[%c0_19, %c0_20], %42 {strides = array<i32>} : memref<8x128xf32, #tpu.memory_space<vmem>>, vector<8x128xf32>,
    %c0_21 = arith.constant 0 : index
    %c0_22 = arith.constant 0 : index
    %44 = vector.load %arg7[%c0_21, %c0_22] : memref<8x128xf32, #tpu.memory_space<vmem>>, vector<8x128xf32>
    %45 = arith.addf %44, %34 : vector<8x128xf32>
    %c0_23 = arith.constant 0 : index
    %c0_24 = arith.constant 0 : index
    %46 = vector.load %arg7[%c0_23, %c0_24] : memref<8x128xf32, #tpu.memory_space<vmem>>, vector<8x128xf32>
    tpu.vector_store %arg7[%c0_23, %c0_24], %45 {strides = array<i32>} : memref<8x128xf32, #tpu.memory_space<vmem>>, vector<8x128xf32>,
    %c0_25 = arith.constant 0 : index
    %c0_26 = arith.constant 0 : index
    %47 = vector.load %arg8[%c0_25, %c0_26] : memref<8x128xf32, #tpu.memory_space<vmem>>, vector<8x128xf32>
    %48 = arith.addf %47, %37 : vector<8x128xf32>
    %c0_27 = arith.constant 0 : index
    %c0_28 = arith.constant 0 : index
    %49 = vector.load %arg8[%c0_27, %c0_28] : memref<8x128xf32, #tpu.memory_space<vmem>>, vector<8x128xf32>
    tpu.vector_store %arg8[%c0_27, %c0_28], %48 {strides = array<i32>} : memref<8x128xf32, #tpu.memory_space<vmem>>, vector<8x128xf32>,
    %c0_i32_29 = arith.constant 0 : i32
    %50 = arith.cmpi eq, %arg1, %c0_i32_29 : i32
    %51 = arith.extui %50 : i1 to i32
    %c0_i32_30 = arith.constant 0 : i32
    %52 = arith.cmpi ne, %51, %c0_i32_30 : i32
    scf.if %52 {
      %c0_31 = arith.constant 0 : index
      %c0_32 = arith.constant 0 : index
      %53 = vector.load %arg5[%c0_31, %c0_32] : memref<8x128xf32, #tpu.memory_space<vmem>>, vector<8x128xf32>
      %54 = vector.shape_cast %53 : vector<8x128xf32> to vector<1x8x128xf32>
      %cst_33 = arith.constant dense<0.000000e+00> : vector<1xf32>
      %55 = vector.multi_reduction <add>, %54, %cst_33 [1, 2] : vector<1x8x128xf32> to vector<1xf32>
      %56 = vector.shape_cast %55 : vector<1xf32> to vector<1x1x1xf32>
      %57 = vector.extract %56[0, 0, 0] : f32 from vector<1x1x1xf32>
      %c0_34 = arith.constant 0 : index
      %c0_35 = arith.constant 0 : index
      %58 = vector.load %arg6[%c0_34, %c0_35] : memref<8x128xf32, #tpu.memory_space<vmem>>, vector<8x128xf32>
      %59 = vector.shape_cast %58 : vector<8x128xf32> to vector<1x8x128xf32>
      %cst_36 = arith.constant dense<0.000000e+00> : vector<1xf32>
      %60 = vector.multi_reduction <add>, %59, %cst_36 [1, 2] : vector<1x8x128xf32> to vector<1xf32>
      %61 = vector.shape_cast %60 : vector<1xf32> to vector<1x1x1xf32>
      %62 = vector.extract %61[0, 0, 0] : f32 from vector<1x1x1xf32>
      %c0_37 = arith.constant 0 : index
      %c0_38 = arith.constant 0 : index
      %63 = vector.load %arg7[%c0_37, %c0_38] : memref<8x128xf32, #tpu.memory_space<vmem>>, vector<8x128xf32>
      %64 = vector.shape_cast %63 : vector<8x128xf32> to vector<1x8x128xf32>
      %cst_39 = arith.constant dense<0.000000e+00> : vector<1xf32>
      %65 = vector.multi_reduction <add>, %64, %cst_39 [1, 2] : vector<1x8x128xf32> to vector<1xf32>
      %66 = vector.shape_cast %65 : vector<1xf32> to vector<1x1x1xf32>
      %67 = vector.extract %66[0, 0, 0] : f32 from vector<1x1x1xf32>
      %c0_40 = arith.constant 0 : index
      %c0_41 = arith.constant 0 : index
      %68 = vector.load %arg8[%c0_40, %c0_41] : memref<8x128xf32, #tpu.memory_space<vmem>>, vector<8x128xf32>
      %69 = vector.shape_cast %68 : vector<8x128xf32> to vector<1x8x128xf32>
      %cst_42 = arith.constant dense<0.000000e+00> : vector<1xf32>
      %70 = vector.multi_reduction <add>, %69, %cst_42 [1, 2] : vector<1x8x128xf32> to vector<1xf32>
      %71 = vector.shape_cast %70 : vector<1xf32> to vector<1x1x1xf32>
      %72 = vector.extract %71[0, 0, 0] : f32 from vector<1x1x1xf32>
      %cst_43 = arith.constant 2.000000e+00 : f32
      %73 = arith.mulf %cst_43, %57 : f32
      %cst_44 = arith.constant 1.000000e+00 : f32
      %74 = arith.addf %73, %cst_44 : f32
      %75 = arith.addf %62, %67 : f32
      %cst_45 = arith.constant 1.000000e+00 : f32
      %76 = arith.addf %75, %cst_45 : f32
      %77 = arith.divf %74, %76 : f32
      %cst_46 = arith.constant 1.000000e+00 : f32
      %78 = arith.subf %cst_46, %77 : f32
      %cst_47 = arith.constant 0.000000e+00 : f32
      %79 = arith.subf %cst_47, %72 : f32
      %cst_48 = arith.constant 9.765625E-4 : f32
      %80 = arith.mulf %79, %cst_48 : f32
      %81 = arith.addf %78, %80 : f32
      %82 = vector.broadcast %81 : f32 to vector<8x128xf32>
      %c0_49 = arith.constant 0 : index
      %c0_50 = arith.constant 0 : index
      %c0_51 = arith.constant 0 : index
      %83 = vector.load %arg4[%c0_49, %c0_50, %c0_51] : memref<1x8x128xf32, #tpu.memory_space<vmem>>, vector<1x8x128xf32>
      %84 = vector.shape_cast %83 : vector<1x8x128xf32> to vector<8x128xf32>
      %85 = vector.shape_cast %82 : vector<8x128xf32> to vector<1x8x128xf32>
      tpu.vector_store %arg4[%c0_49, %c0_50, %c0_51], %85 {strides = array<i32>} : memref<1x8x128xf32, #tpu.memory_space<vmem>>, vector<1x8x128xf32>,
    } else {
    }
    return
  }
  func.func @transform_0(%arg0: i32, %arg1: i32) -> (i32, i32, i32) {
    %c0_i32 = arith.constant 0 : i32
    %c0_i32_0 = arith.constant 0 : i32
    return %arg0, %arg1, %c0_i32 : i32, i32, i32
  }
  func.func @transform_1(%arg0: i32, %arg1: i32) -> (i32, i32, i32) {
    %c0_i32 = arith.constant 0 : i32
    %c0_i32_0 = arith.constant 0 : i32
    return %arg0, %arg1, %c0_i32 : i32, i32, i32
  }
  func.func @transform_2(%arg0: i32, %arg1: i32) -> (i32, i32, i32) {
    %c0_i32 = arith.constant 0 : i32
    %c0_i32_0 = arith.constant 0 : i32
    %c0_i32_1 = arith.constant 0 : i32
    return %arg0, %c0_i32, %c0_i32_0 : i32, i32, i32
  }
}

</mosaic_0001>

<llo_original>
// kernel: tpu_custom_call.1
$region0: #{tpu_custom_call.1}
  #allocation0 [shape = 'u32[]', space=smem, size = 0x4, offset = 0x4, fixed_abs, tag = 'smem constant byte address 0x4 - core index']
  #allocation1 [shape = 'u32[144,128]{1,0:T(1,128)}', space=vmem, size = 0x12000, scoped, tag = 'internal scratch']
  #allocation2 [shape = 'f32[8,128]{1,0:T(8,128)}', space=vmem, size = 0x1000, scoped, tag = 'scratch operand']
  #allocation3 [shape = 'f32[8,128]{1,0:T(8,128)}', space=vmem, size = 0x1000, scoped, tag = 'scratch operand']
  #allocation4 [shape = 'f32[8,128]{1,0:T(8,128)}', space=vmem, size = 0x1000, scoped, tag = 'scratch operand']
  #allocation5 [shape = 'f32[8,128]{1,0:T(8,128)}', space=vmem, size = 0x1000, scoped, tag = 'scratch operand']
  %s0 = inlined_call_operand.hbm [shape: f32[2,8,128], index: 0, kind: input, shape index: {}]
  %s1 = inlined_call_operand.hbm [shape: f32[2,8,128], index: 1, kind: input, shape index: {}]
  %s2 = inlined_call_operand.hbm [shape: f32[2,8,128], index: 2, kind: output, shape index: {}]
  %s3 = sld [smem:[#allocation0]]
  $region57: #{tpu_custom_call.1} parent=0
    _
  %s5 = ssub.s32 1, %s3
  %s6 = scalar_select 0, %s5, %s3
  $region1: #{tpu_custom_call.1} parent=0
    #allocation6 [shape = 'u8[8192]{0}', space=vmem, size = 0x2000, scoped, tag = 'input window, operand 0']
    #allocation7 [shape = 's32[2]{0}', space=sflag, size = 0x8, scoped, tag = 'scoped memory for tpu_custom_call.1']
    #allocation8 [shape = 's32[2]{0}', space=sflag, size = 0x8, scoped, tag = 'scoped memory for tpu_custom_call.1']
    #allocation9 [shape = 'u8[8192]{0}', space=vmem, size = 0x2000, scoped, tag = 'input window, operand 1']
    #allocation10 [shape = 's32[2]{0}', space=sflag, size = 0x8, scoped, tag = 'scoped memory for tpu_custom_call.1']
    #allocation11 [shape = 'u8[8192]{0}', space=vmem, size = 0x2000, scoped, tag = 'output window, operand 0']
    %7 = vsyncpa [#allocation7], 0
    %s8 = scalar_lea.sflag [#allocation7], 1
    %9 = vsyncpa %s8, 0
    %10 = vsyncpa [#allocation10], 0
    %s11 = scalar_lea.sflag [#allocation10], 1
    %12 = vsyncpa %s11, 0
    %13 = vsyncpa [#allocation8], 0
    %s14 = scalar_lea.sflag [#allocation8], 1
    %15 = vsyncpa %s14, 0
    loop: start=0, step=1, limit=4
    $region2: #{tpu_custom_call.1} parent=1 // loop_pre_header
      _
    $region3: #{tpu_custom_call.1} parent=1 // loop_header
      %s17 = sphi 0, %s21
      %p18 = scmp.ge.s32.totalorder %s17, 4
      %s24 = sphi 0, %s36
      %s25 = sphi 0, %s32
      %s26 = sphi 0, %s24
      %s27 = sphi 0, %s25
      %s28 = sphi 0, %s26
      %s29 = sphi 0, %s27
      %s41 = sphi 0, %s43
      %s44 = sphi 0, %s41
      %s45 = sphi 0, %s44
      %s61 = sphi 0, %s45
      %s69 = sphi 0, %s71
      %s72 = sphi 0, %s69
      %s73 = sphi 0, %s72
      %s89 = sphi 0, %s73
      %s95 = sphi 0, %s97
      %s98 = sphi 0, %s95
      %s99 = sphi 0, %s98
      %s115 = sphi 0, %s99
    $region4: #{tpu_custom_call.1} parent=1 // loop_header_branch
      %20 = sbr.rel (%p18) target = $region8
    $region5: #{tpu_custom_call.1} parent=1 // loop_body
      %s22 = ssub.s32 %s17, 1
      %s23 = ssub.s32 %s17, 2
      %s30 = sadd.s32 1, %s25
      %p31 = scmp.ge.s32.totalorder %s30, 1
      %s32 = scalar_select %p31, 0, %s30
      %s33 = sadd.s32 1, %s24
      %s34 = scalar_select %p31, %s33, %s24
      %p35 = scmp.ge.s32.totalorder %s34, 2
      %s36 = scalar_select %p35, 0, %s34
      %s37 = ssub.s32 %s24, %s36
      %s38 = ssub.s32 %s25, %s32
      %s39 = sor.u32 %s37, %s38
      %p40 = scmp.eq.s32.totalorder %s39, 0
      %s42 = sadd.s32 %s41, 1
      %s43 = scalar_select %p40, %s41, %s42
      %p46 = pneg %p40
      %p47 = scmp.eq.s32.totalorder %s17, 1
      %p48 = por %p46, %p47
      %p49 = scmp.ne.s32.totalorder %s41, %s44
      %p50 = scmp.eq.s32.totalorder %s17, 0
      %p51 = por %p49, %p50
      %p52 = scmp.ne.s32.totalorder %s41, %s44
      %p53 = scmp.eq.s32.totalorder %s22, 1
      %p54 = por %p52, %p53
      %p55 = scmp.ne.s32.totalorder %s44, %s45
      %p56 = scmp.eq.s32.totalorder %s22, 0
      %p57 = por %p55, %p56
      %p58 = scmp.ne.s32.totalorder %s44, %s45
      %p59 = scmp.eq.s32.totalorder %s23, 1
      %p60 = por %p58, %p59
      %p62 = scmp.ne.s32.totalorder %s45, %s61
      %p63 = scmp.eq.s32.totalorder %s23, 0
      %p64 = por %p62, %p63
      %s65 = ssub.s32 %s24, %s36
      %s66 = ssub.s32 %s25, %s32
      %s67 = sor.u32 %s65, %s66
      %p68 = scmp.eq.s32.totalorder %s67, 0
      %s70 = sadd.s32 %s69, 1
      %s71 = scalar_select %p68, %s69, %s70
      %p74 = pneg %p68
      %p75 = scmp.eq.s32.totalorder %s17, 1
      %p76 = por %p74, %p75
      %p77 = scmp.ne.s32.totalorder %s69, %s72
      %p78 = scmp.eq.s32.totalorder %s17, 0
      %p79 = por %p77, %p78
      %p80 = scmp.ne.s32.totalorder %s69, %s72
      %p81 = scmp.eq.s32.totalorder %s22, 1
      %p82 = por %p80, %p81
      %p83 = scmp.ne.s32.totalorder %s72, %s73
      %p84 = scmp.eq.s32.totalorder %s22, 0
      %p85 = por %p83, %p84
      %p86 = scmp.ne.s32.totalorder %s72, %s73
      %p87 = scmp.eq.s32.totalorder %s23, 1
      %p88 = por %p86, %p87
      %p90 = scmp.ne.s32.totalorder %s73, %s89
      %p91 = scmp.eq.s32.totalorder %s23, 0
      %p92 = por %p90, %p91
      %s93 = ssub.s32 %s24, %s36
      %p94 = scmp.eq.s32.totalorder %s93, 0
      %s96 = sadd.s32 %s95, 1
      %s97 = scalar_select %p94, %s95, %s96
      %p100 = pneg %p94
      %p101 = scmp.eq.s32.totalorder %s17, 1
      %p102 = por %p100, %p101
      %p103 = scmp.ne.s32.totalorder %s95, %s98
      %p104 = scmp.eq.s32.totalorder %s17, 0
      %p105 = por %p103, %p104
      %p106 = scmp.ne.s32.totalorder %s95, %s98
      %p107 = scmp.eq.s32.totalorder %s22, 1
      %p108 = por %p106, %p107
      %p109 = scmp.ne.s32.totalorder %s98, %s99
      %p110 = scmp.eq.s32.totalorder %s22, 0
      %p111 = por %p109, %p110
      %p112 = scmp.ne.s32.totalorder %s98, %s99
      %p113 = scmp.eq.s32.totalorder %s23, 1
      %p114 = por %p112, %p113
      %p116 = scmp.ne.s32.totalorder %s99, %s115
      %p117 = scmp.eq.s32.totalorder %s23, 0
      %p118 = por %p116, %p117
      %p119 = scmp.le.s32.totalorder 1, %s17
      %p120 = scmp.lt.s32.totalorder %s17, 3
      %p121 = pnand %p119, %p120
      %p122 = pneg %p121
      // Predicated region
      $region9: #{tpu_custom_call.1} parent=5 // pred_check
        _
      $region10: #{tpu_custom_call.1} parent=5 // pred_check_branch
        %124 = sbr.rel (%p121) target = $region12
      $region11: #{tpu_custom_call.1} parent=5 // pred_region
        %s125 = ssub.s32 %s17, 1
      $region12: #{tpu_custom_call.1} parent=5 // pred_fallthru
        _
      %p126 = scmp.lt.s32.totalorder %s17, 2
      // Predicated region
      $region13: #{tpu_custom_call.1} parent=5 // pred_check
        %p127 = pneg %p126
      $region14: #{tpu_custom_call.1} parent=5 // pred_check_branch
        %129 = sbr.rel (%p127) target = $region16
      $region15: #{tpu_custom_call.1} parent=5 // pred_region
        // Predicated region
        $region17: #{tpu_custom_call.1} parent=15 // pred_check
          %p130 = pneg %p51
        $region18: #{tpu_custom_call.1} parent=15 // pred_check_branch
          %132 = sbr.rel (%p130) target = $region20
        $region19: #{tpu_custom_call.1} parent=15 // pred_region
          %s133 = sand.u32 %s41, 1
          %s134 = scalar_lea.sflag [#allocation7], %s133
          %s135 = sand.u32 %s41, 1
          %s136 = smul.addr %s135, 8
          %s137 = scalar_lea.vmem [#allocation6], %s136
          %s139 = ssub.s32 128, 128
          %140 = vsyncadd %s134, %s139
          %s141 = sadd.s32 %s25, %s24
          %s142 = smul.addr %s141, 128
          %s143 = scalar_lea.hbm %s0, %s142
          %s145 = sshll.u32 %s137, 4
          %s146 = int_to_ptr.vmem [resolvable:$true] %s145
          %148 = dma.hbm_to_vmem [thread:$0]  %s143, 128, %s146, %s134
        $region20: #{tpu_custom_call.1} parent=15 // pred_fallthru
          _
        // Predicated region
        $region21: #{tpu_custom_call.1} parent=15 // pred_check
          %p149 = pneg %p79
        $region22: #{tpu_custom_call.1} parent=15 // pred_check_branch
          %151 = sbr.rel (%p149) target = $region24
        $region23: #{tpu_custom_call.1} parent=15 // pred_region
          %s152 = sand.u32 %s69, 1
          %s153 = scalar_lea.sflag [#allocation10], %s152
          %s154 = sand.u32 %s69, 1
          %s155 = smul.addr %s154, 8
          %s156 = scalar_lea.vmem [#allocation9], %s155
          %s158 = ssub.s32 128, 128
          %159 = vsyncadd %s153, %s158
          %s160 = sadd.s32 %s25, %s24
          %s161 = smul.addr %s160, 128
          %s162 = scalar_lea.hbm %s1, %s161
          %s164 = sshll.u32 %s156, 4
          %s165 = int_to_ptr.vmem [resolvable:$true] %s164
          %167 = dma.hbm_to_vmem [thread:$0]  %s162, 128, %s165, %s153
        $region24: #{tpu_custom_call.1} parent=15 // pred_fallthru
          _
      $region16: #{tpu_custom_call.1} parent=5 // pred_fallthru
        _
      %p168 = scmp.le.s32.totalorder 1, %s17
      %p169 = scmp.lt.s32.totalorder %s17, 3
      %p170 = pnand %p168, %p169
      %p171 = pneg %p170
      // Predicated region
      $region25: #{tpu_custom_call.1} parent=5 // pred_check
        _
      $region26: #{tpu_custom_call.1} parent=5 // pred_check_branch
        %173 = sbr.rel (%p170) target = $region28
      $region27: #{tpu_custom_call.1} parent=5 // pred_region
        %s174 = ssub.s32 %s17, 1
        %s175 = sand.u32 %s44, 1
        %s176 = scalar_lea.sflag [#allocation7], %s175
        %s177 = sand.u32 %s44, 1
        %s178 = smul.addr %s177, 8
        %s179 = scalar_lea.vmem [#allocation6], %s178
        // Predicated region
        $region29: #{tpu_custom_call.1} parent=27 // pred_check
          %p180 = pneg %p57
        $region30: #{tpu_custom_call.1} parent=27 // pred_check_branch
          %182 = sbr.rel (%p180) target = $region32
        $region31: #{tpu_custom_call.1} parent=27 // pred_region
          %183 = dma.done %s176, 128
        $region32: #{tpu_custom_call.1} parent=27 // pred_fallthru
          _
        %s184 = sand.u32 %s72, 1
        %s185 = scalar_lea.sflag [#allocation10], %s184
        %s186 = sand.u32 %s72, 1
        %s187 = smul.addr %s186, 8
        %s188 = scalar_lea.vmem [#allocation9], %s187
        // Predicated region
        $region33: #{tpu_custom_call.1} parent=27 // pred_check
          %p189 = pneg %p85
        $region34: #{tpu_custom_call.1} parent=27 // pred_check_branch
          %191 = sbr.rel (%p189) target = $region36
        $region35: #{tpu_custom_call.1} parent=27 // pred_region
          %192 = dma.done %s185, 128
        $region36: #{tpu_custom_call.1} parent=27 // pred_fallthru
          _
        %s193 = sand.u32 %s44, 1
        %s194 = scalar_lea.sflag [#allocation7], %s193
        %s195 = sand.u32 %s44, 1
        %s196 = smul.addr %s195, 8
        %s197 = scalar_lea.vmem [#allocation6], %s196
        %p198 = pneg %p57
        %p199 = pneg %p54
        %s200 = sand.u32 %s72, 1
        %s201 = scalar_lea.sflag [#allocation10], %s200
        %s202 = sand.u32 %s72, 1
        %s203 = smul.addr %s202, 8
        %s204 = scalar_lea.vmem [#allocation9], %s203
        %p205 = pneg %p85
        %p206 = pneg %p82
        %p207 = pneg %p111
        %p208 = pneg %p108
        %s209 = sand.u32 %s98, 1
        %s210 = scalar_lea.sflag [#allocation8], %s209
        %s211 = sand.u32 %s98, 1
        %s212 = smul.addr %s211, 8
        %s213 = scalar_lea.vmem [#allocation11], %s212
        %p214 = scmp.eq.s32.totalorder %s27, 0
        // Predicated region
        $region37: #{tpu_custom_call.1} parent=27 // pred_check
          %p215 = pneg %p214
        $region38: #{tpu_custom_call.1} parent=27 // pred_check_branch
          %217 = sbr.rel (%p215) target = $region40
        $region39: #{tpu_custom_call.1} parent=27 // pred_region
          %218 = vst [vmem:[#allocation2] sm:$0xff] 0.0
          %219 = vst [vmem:[#allocation3] sm:$0xff] 0.0
          %220 = vst [vmem:[#allocation4] sm:$0xff] 0.0
          %221 = vst [vmem:[#allocation5] sm:$0xff] 0.0
        $region40: #{tpu_custom_call.1} parent=27 // pred_fallthru
          _
        %v222 = vld [vmem:[%s179] sm:$0xff]
        %v223 = vld [vmem:[%s188] sm:$0xff]
        %v224 = vlog2.pop %v222
        %v225 = vmul.f32 %v224, 0.6931472
        %v226 = vmax.f32 %v225, -100.0
        %v227 = vsub.f32 1.0, %v222
        %v228 = vlog2.pop %v227
        %v229 = vmul.f32 %v228, 0.6931472
        %v230 = vmax.f32 %v229, -100.0
        %v231 = vmul.f32 %v223, %v226
        %v232 = vsub.f32 1.0, %v223
        %v233 = vmul.f32 %v232, %v230
        %v234 = vadd.f32 %v231, %v233
        %v235 = vmul.f32 %v222, %v223
        %v236 = vadd.f32 %v235, 0.0
        %v237 = vadd.f32 %v236, 0.0
        %v238 = vadd.f32 %v222, 0.0
        %v239 = vadd.f32 %v238, 0.0
        %v240 = vadd.f32 %v223, 0.0
        %v241 = vadd.f32 %v240, 0.0
        %v242 = vadd.f32 %v234, 0.0
        %v243 = vadd.f32 %v242, 0.0
        %v244 = vld [vmem:[#allocation2] sm:$0xff]
        %v245 = vadd.f32 %v244, %v237
        %246 = vst [vmem:[#allocation2] sm:$0xff] %v245
        %v247 = vld [vmem:[#allocation3] sm:$0xff]
        %v248 = vadd.f32 %v247, %v239
        %249 = vst [vmem:[#allocation3] sm:$0xff] %v248
        %v250 = vld [vmem:[#allocation4] sm:$0xff]
        %v251 = vadd.f32 %v250, %v241
        %252 = vst [vmem:[#allocation4] sm:$0xff] %v251
        %v253 = vld [vmem:[#allocation5] sm:$0xff]
        %v254 = vadd.f32 %v253, %v243
        %255 = vst [vmem:[#allocation5] sm:$0xff] %v254
        // Predicated region
        $region41: #{tpu_custom_call.1} parent=27 // pred_check
          %p256 = pneg %p214
        $region42: #{tpu_custom_call.1} parent=27 // pred_check_branch
          %258 = sbr.rel (%p256) target = $region44
        $region43: #{tpu_custom_call.1} parent=27 // pred_region
          %v259 = vld [vmem:[#allocation2] sm:$0xff]
          %260 = vadd.xlane.f32.xlu0 %v259
          %v261 = vpop.xlane.xlu0 %260
          %v262 = vrot.slane %v261, 4
          %v263 = vadd.f32 %v261, %v262
          %v264 = vrot.slane %v263, 2
          %v265 = vadd.f32 %v263, %v264
          %v266 = vrot.slane %v265, 1
          %v267 = vadd.f32 %v265, %v266
          %s268 = vtos %v267
          %v269 = vld [vmem:[#allocation3] sm:$0xff]
          %270 = vadd.xlane.f32.xlu0 %v269
          %v271 = vpop.xlane.xlu0 %270
          %v272 = vrot.slane %v271, 4
          %v273 = vadd.f32 %v271, %v272
          %v274 = vrot.slane %v273, 2
          %v275 = vadd.f32 %v273, %v274
          %v276 = vrot.slane %v275, 1
          %v277 = vadd.f32 %v275, %v276
          %s278 = vtos %v277
          %v279 = vld [vmem:[#allocation4] sm:$0xff]
          %280 = vadd.xlane.f32.xlu0 %v279
          %v281 = vpop.xlane.xlu0 %280
          %v282 = vrot.slane %v281, 4
          %v283 = vadd.f32 %v281, %v282
          %v284 = vrot.slane %v283, 2
          %v285 = vadd.f32 %v283, %v284
          %v286 = vrot.slane %v285, 1
          %v287 = vadd.f32 %v285, %v286
          %s288 = vtos %v287
          %v289 = vld [vmem:[#allocation5] sm:$0xff]
          %290 = vadd.xlane.f32.xlu0 %v289
          %v291 = vpop.xlane.xlu0 %290
          %v292 = vrot.slane %v291, 4
          %v293 = vadd.f32 %v291, %v292
          %v294 = vrot.slane %v293, 2
          %v295 = vadd.f32 %v293, %v294
          %v296 = vrot.slane %v295, 1
          %v297 = vadd.f32 %v295, %v296
          %s298 = vtos %v297
          %s299 = smul.f32 %s268, 2.0
          %s300 = sadd.f32 %s299, 1.0
          %s301 = sadd.f32 %s278, %s288
          %s302 = sadd.f32 %s301, 1.0
          %v303 = vstv %s302
          %v304 = vrcp.pop %v303
          %s305 = vtos %v304
          %s306 = smul.f32 %s300, %s305
          %s307 = ssub.f32 1.0, %s306
          %s308 = ssub.f32 0.0, %s298
          %s309 = smul.f32 %s308, 0.0009765625
          %s310 = sadd.f32 %s307, %s309
          %v311 = vstv %s310
          %312 = vst [vmem:[%s213] sm:$0xff] %v311
        $region44: #{tpu_custom_call.1} parent=27 // pred_fallthru
          _
        %s313 = sand.u32 %s98, 1
        %s314 = scalar_lea.sflag [#allocation8], %s313
        %s315 = sand.u32 %s98, 1
        %s316 = smul.addr %s315, 8
        %s317 = scalar_lea.vmem [#allocation11], %s316
        // Predicated region
        $region45: #{tpu_custom_call.1} parent=27 // pred_check
          %p318 = pneg %p108
        $region46: #{tpu_custom_call.1} parent=27 // pred_check_branch
          %320 = sbr.rel (%p318) target = $region48
        $region47: #{tpu_custom_call.1} parent=27 // pred_region
          %s322 = ssub.s32 128, 128
          %323 = vsyncadd %s314, %s322
          %s324 = smul.addr %s26, 128
          %s325 = scalar_lea.hbm %s2, %s324
          %s327 = sshll.u32 %s317, 4
          %s328 = int_to_ptr.vmem [resolvable:$true] %s327
          %330 = dma.vmem_to_hbm [thread:$0]  %s328, 128, %s325, %s314
        $region48: #{tpu_custom_call.1} parent=27 // pred_fallthru
          _
      $region28: #{tpu_custom_call.1} parent=5 // pred_fallthru
        _
      %p331 = scmp.le.s32.totalorder 2, %s17
      // Predicated region
      $region49: #{tpu_custom_call.1} parent=5 // pred_check
        %p332 = pneg %p331
      $region50: #{tpu_custom_call.1} parent=5 // pred_check_branch
        %334 = sbr.rel (%p332) target = $region52
      $region51: #{tpu_custom_call.1} parent=5 // pred_region
        %s335 = ssub.s32 %s17, 2
        // Predicated region
        $region53: #{tpu_custom_call.1} parent=51 // pred_check
          %p336 = pneg %p114
        $region54: #{tpu_custom_call.1} parent=51 // pred_check_branch
          %338 = sbr.rel (%p336) target = $region56
        $region55: #{tpu_custom_call.1} parent=51 // pred_region
          %s339 = sand.u32 %s99, 1
          %s340 = scalar_lea.sflag [#allocation8], %s339
          %s341 = sand.u32 %s99, 1
          %s342 = smul.addr %s341, 8
          %s343 = scalar_lea.vmem [#allocation11], %s342
          %344 = dma.done %s340, 128
        $region56: #{tpu_custom_call.1} parent=51 // pred_fallthru
          _
      $region52: #{tpu_custom_call.1} parent=5 // pred_fallthru
        _
    $region6: #{tpu_custom_call.1} parent=1 // loop_footer
      %s21 = sadd.s32 1, %s17
    $region7: #{tpu_custom_call.1} parent=1 // loop_footer_branch
      %16 = sbr.rel target = $region3
    $region8: #{tpu_custom_call.1} parent=1 // loop_exit
      _
    %345 = vsyncpa [#allocation7], 1
    %s346 = scalar_lea.sflag [#allocation7], 1
    %347 = vsyncpa %s346, 1
    %348 = vsyncpa [#allocation10], 1
    %s349 = scalar_lea.sflag [#allocation10], 1
    %350 = vsyncpa %s349, 1
    %351 = vsyncpa [#allocation8], 1
    %s352 = scalar_lea.sflag [#allocation8], 1
    %353 = vsyncpa %s352, 1

</llo_original>
